<compile_context>
chip_gen: v7x
topology: tpu7x:2x2x1
jax: 0.10.0
libtpu: 0.0.40
codegen_flags: <defaults>
</compile_context>

<pallas_src>
import functools

import jax
import jax.numpy as jnp
from jax.experimental import pallas as pl
from jax.experimental.pallas import tpu as pltpu


# ------------------------------ helpers ------------------------------------ #
def _round_up(n, m):
    return ((n + m - 1) // m) * m


def _pick_tile_b(batch, cap):
    """Batch tile: multiple of 128, <= cap, and >=2 grid blocks when B > 128
    so dimension_semantics=('parallel',) can shard across v7x's two TCs."""
    b_pad = _round_up(batch, 128)
    if b_pad <= 128:
        return 128
    return min(cap, _round_up(-(-b_pad // 2), 128))


def _resident(shape):
    """Full-array block with a constant index_map -> stays resident in VMEM."""
    return pl.BlockSpec(shape, lambda i: (0, 0))


# ------------------------- single-evaluation kernel ------------------------ #
def _ode_mlp_kernel(x_ref, w1_ref, b1_ref, w2_ref, b2_ref, w3_ref, b3_ref, o_ref):
    # x_ref: [tile_b, D_in] f32.  Weights: [out, in] f32.
    # b1/b2: [out, 1] (column, for the lane-dense [H, tile_b] intermediates),
    # b3:    [1, D_out] (row, so the final matmul writes batch-major directly).
    x = x_ref[...]

    # Layer 1: W1 @ x^T via dot_general (rhs contraction on dim 1) -> [H, tile_b]
    h = jax.lax.dot_general(
        w1_ref[...], x, (((1,), (1,)), ((), ())),
        preferred_element_type=jnp.float32) + b1_ref[...]
    h = jnp.tanh(h)                                           # latent_act = 'tanh'

    # Layer 2: standard W2 @ h -> [H, tile_b]
    h = jnp.dot(w2_ref[...], h, preferred_element_type=jnp.float32) + b2_ref[...]
    h = jnp.tanh(h)                                           # latent_act = 'tanh'

    # Layer 3: h^T @ W3^T via dot_general (lhs dim 0 with rhs dim 1)
    # -> [tile_b, D_out], i.e. batch-major output with no explicit transpose.
    out = jax.lax.dot_general(
        h, w3_ref[...], (((0,), (1,)), ((), ())),
        preferred_element_type=jnp.float32) + b3_ref[...]
    o_ref[...] = out.astype(o_ref.dtype)                      # final act = linear


@jax.jit
def ode_function(t, x, params):
    """Forward pass of ODEFunction. `t` is unused (matches the torch forward)."""
    del t
    w1, b1, w2, b2, w3, b3 = params
    B, D_in = x.shape
    D_out = w3.shape[0]

    tile_b = _pick_tile_b(B, cap=512)
    n_blocks = pl.cdiv(B, tile_b)
    B_pad = n_blocks * tile_b
    xp = x if B_pad == B else jnp.pad(x, ((0, B_pad - B), (0, 0)))

    out = pl.pallas_call(
        _ode_mlp_kernel,
        out_shape=jax.ShapeDtypeStruct((B_pad, D_out), x.dtype),
        grid=(n_blocks,),
        in_specs=[
            pl.BlockSpec((tile_b, D_in), lambda i: (i, 0)),   # x tile (batch-major)
            _resident(w1.shape), _resident(b1.shape),         # W1 [H,Din], b1 [H,1]
            _resident(w2.shape), _resident(b2.shape),         # W2 [H,H],   b2 [H,1]
            _resident(w3.shape), _resident(b3.shape),         # W3 [Do,H],  b3 [1,Do]
        ],
        out_specs=pl.BlockSpec((tile_b, D_out), lambda i: (i, 0)),
        compiler_params=pltpu.CompilerParams(
            dimension_semantics=("parallel",)),
    )(xp, w1, b1, w2, b2, w3, b3)

    return out if B_pad == B else out[:B]


# ------------------ fused multi-evaluation (RK4) kernel --------------------- #
def _make_rk4_kernel(dt, num_steps):
    """num_steps fixed-step RK4 steps = 4*num_steps dynamics evaluations, all in
    one pallas_call; weights and the [D, tile_b] state never leave VMEM/vregs."""
    def kernel(x_ref, w1_ref, b1_ref, w2_ref, b2_ref, w3_ref, b3_ref, o_ref):
        w1 = w1_ref[...]; b1 = b1_ref[...]
        w2 = w2_ref[...]; b2 = b2_ref[...]
        w3 = w3_ref[...]; b3 = b3_ref[...]           # [D, 1] column bias here

        def f(y):                                     # y: [D, tile_b] (lane-dense)
            h = jnp.tanh(jnp.dot(w1, y, preferred_element_type=jnp.float32) + b1)
            h = jnp.tanh(jnp.dot(w2, h, preferred_element_type=jnp.float32) + b2)
            return jnp.dot(w3, h, preferred_element_type=jnp.float32) + b3

        def step(_, y):                               # accumulator form: lower vreg pressure
            k = f(y)                                  # k1
            acc = k
            k = f(y + (0.5 * dt) * k)                 # k2
            acc = acc + 2.0 * k
            k = f(y + (0.5 * dt) * k)                 # k3
            acc = acc + 2.0 * k
            k = f(y + dt * k)                         # k4
            return y + (dt / 6.0) * (acc + k)

        y = jax.lax.fori_loop(0, num_steps, step, x_ref[...].astype(jnp.float32))
        o_ref[...] = y.astype(o_ref.dtype)
    return kernel


@functools.partial(jax.jit, static_argnames=("dt", "num_steps"))
def ode_integrate_rk4(x, params, *, dt, num_steps):
    """Integrate dy/dt = ODEFunction(t, y) with fixed-step RK4, fused into a
    single pallas_call (the one-time swapaxes/pad here is amortized over
    4*num_steps dynamics evaluations)."""
    w1, b1, w2, b2, w3, b3 = params
    B, D = x.shape
    assert w3.shape[0] == D and w1.shape[1] == D, "state must feed back (D_out == D_in)"

    tile_b = _pick_tile_b(B, cap=256)     # RK4 carries more live vregs -> smaller cap
    n_blocks = pl.cdiv(B, tile_b)
    B_pad = n_blocks * tile_b

    xT = jnp.swapaxes(x, 0, 1)                               # [D, B] (batch on lanes)
    if B_pad != B:
        xT = jnp.pad(xT, ((0, 0), (0, B_pad - B)))
    b3c = jnp.reshape(b3, (D, 1))                            # column bias for W@y form

    outT = pl.pallas_call(
        _make_rk4_kernel(float(dt), int(num_steps)),
        out_shape=jax.ShapeDtypeStruct((D, B_pad), x.dtype),
        grid=(n_blocks,),
        in_specs=[
            pl.BlockSpec((D, tile_b), lambda i: (0, i)),
            _resident(w1.shape), _resident(b1.shape),
            _resident(w2.shape), _resident(b2.shape),
            _resident(w3.shape), _resident((D, 1)),
        ],
        out_specs=pl.BlockSpec((D, tile_b), lambda i: (0, i)),
        compiler_params=pltpu.CompilerParams(
            dimension_semantics=("parallel",)),
    )(xT, w1, b1, w2, b2, w3, b3c)

    return jnp.swapaxes(outT[:, :B], 0, 1)


# --------------------------- parameter creation ----------------------------- #
def init_params(key, latent_dim, num_hidden, num_layers):
    """Deterministic init mimicking torch nn.Linear (uniform +/- 1/sqrt(fan_in)).

    Kernel layout: weights [out, in] f32; b1/b2 as [out, 1] columns, final bias
    as [1, out] row (so the last matmul writes batch-major with no transpose).
    """
    assert num_layers == 2, "kernel is fused for num_layers=2 (3 linear layers)"
    dims = [latent_dim] + num_layers * [num_hidden] + [latent_dim]
    n_linear = len(dims) - 1
    params = []
    for idx, (n_in, n_out) in enumerate(zip(dims[:-1], dims[1:])):
        key, kw, kb = jax.random.split(key, 3)
        bound = float(n_in) ** -0.5
        w = jax.random.uniform(kw, (n_out, n_in), jnp.float32, -bound, bound)
        b = jax.random.uniform(kb, (n_out,), jnp.float32, -bound, bound)
        b = b.reshape(1, n_out) if idx == n_linear - 1 else b.reshape(n_out, 1)
        params.extend([w, b])
    return tuple(params)


# ------------------------------- references --------------------------------- #
def ode_function_ref(t, x, params):
    """Pure-JAX float32 reference of the same forward pass (for verification)."""
    del t
    w1, b1, w2, b2, w3, b3 = params
    h = jnp.tanh(x @ w1.T + b1[:, 0])
    h = jnp.tanh(h @ w2.T + b2[:, 0])
    return h @ w3.T + b3[0, :]


def rk4_ref(x, params, dt, num_steps):
    def f(y):
        return ode_function_ref(0.0, y, params)
    y = x
    for _ in range(num_steps):
        k1 = f(y)
        k2 = f(y + 0.5 * dt * k1)
        k3 = f(y + 0.5 * dt * k2)
        k4 = f(y + dt * k3)
        y = y + (dt / 6.0) * (k1 + 2.0 * k2 + 2.0 * k3 + k4)
    return y


# --------------------------------- main ------------------------------------ #
if __name__ == "__main__":
    # args: latent_dim=32, num_hidden=64, num_layers=2, latent_act='tanh'
    latent_dim, num_hidden, num_layers = 32, 64, 2

    key = jax.random.PRNGKey(0)
    key, kx1, kx2 = jax.random.split(key, 3)
    params = init_params(key, latent_dim, num_hidden, num_layers)
    t = jnp.float32(0.0)  # unused, mirrors the torch signature

    # Single forward evaluation (exact ODEFunction.forward semantics):
    # tile-divisible batch (2 parallel blocks) and padded batch.
    for batch, kx in ((512, kx1), (100, kx2)):
        x = jax.random.normal(kx, (batch, latent_dim), jnp.float32)
        out = jax.block_until_ready(ode_function(t, x, params))
        ref = ode_function_ref(t, x, params)
        assert out.shape == (batch, latent_dim)
        err = float(jnp.max(jnp.abs(out - ref)))
        assert err < 2e-2, err   # f32 operands, f32 accumulation (MXU default precision)

    # Fused RK4 integration: 8 steps x 4 dynamics evaluations per pallas_call.
    x = jax.random.normal(kx1, (512, latent_dim), jnp.float32)
    y = jax.block_until_ready(ode_integrate_rk4(x, params, dt=0.05, num_steps=8))
    y_ref = rk4_ref(x, params, 0.05, 8)
    assert y.shape == x.shape
    err = float(jnp.max(jnp.abs(y - y_ref)))
    assert err < 2e-2, err

    print("KERNEL_OK")
</pallas_src>

<mosaic_0001>
module attributes {stable_mosaic.version = 11 : i64} {
  func.func @_ode_mlp_kernel(%arg0: i32, %arg1: memref<256x32xf32, #tpu.memory_space<vmem>>, %arg2: memref<64x32xf32, #tpu.memory_space<vmem>>, %arg3: memref<64x1xf32, #tpu.memory_space<vmem>>, %arg4: memref<64x64xf32, #tpu.memory_space<vmem>>, %arg5: memref<64x1xf32, #tpu.memory_space<vmem>>, %arg6: memref<32x64xf32, #tpu.memory_space<vmem>>, %arg7: memref<1x32xf32, #tpu.memory_space<vmem>>, %arg8: memref<256x32xf32, #tpu.memory_space<vmem>>) attributes {dimension_semantics = [#tpu.dimension_semantics<parallel>], iteration_bounds = array<i64: 2>, scalar_prefetch = 0 : i64, scratch_operands = 0 : i64, tpu.core_type = #tpu.core_type<tc>, window_params = [{transform_indices = @transform_0, window_bounds = array<i64: 256, 32>}, {pipeline_mode = #tpu.pipeline_mode<synchronous>, transform_indices = @transform_1, window_bounds = array<i64: 64, 32>}, {pipeline_mode = #tpu.pipeline_mode<synchronous>, transform_indices = @transform_2, window_bounds = array<i64: 64, 1>}, {pipeline_mode = #tpu.pipeline_mode<synchronous>, transform_indices = @transform_3, window_bounds = array<i64: 64, 64>}, {pipeline_mode = #tpu.pipeline_mode<synchronous>, transform_indices = @transform_4, window_bounds = array<i64: 64, 1>}, {pipeline_mode = #tpu.pipeline_mode<synchronous>, transform_indices = @transform_5, window_bounds = array<i64: 32, 64>}, {pipeline_mode = #tpu.pipeline_mode<synchronous>, transform_indices = @transform_6, window_bounds = array<i64: 1, 32>}, {transform_indices = @transform_7, window_bounds = array<i64: 256, 32>}]} {
    %c0 = arith.constant 0 : index
    %c0_0 = arith.constant 0 : index
    %0 = vector.load %arg1[%c0, %c0_0] : memref<256x32xf32, #tpu.memory_space<vmem>>, vector<256x32xf32>
    %c0_1 = arith.constant 0 : index
    %c0_2 = arith.constant 0 : index
    %1 = vector.load %arg2[%c0_1, %c0_2] : memref<64x32xf32, #tpu.memory_space<vmem>>, vector<64x32xf32>
    %cst = arith.constant dense<0.000000e+00> : vector<64x256xf32>
    %2 = tpu.matmul %1, %0, %cst {dimension_numbers = #tpu.dot_dimension_numbers<[1], [1], [0], [0], [0, 0, 1, 0], [], []>} : vector<64x32xf32>, vector<256x32xf32>, vector<64x256xf32> -> vector<64x256xf32>
    %c0_3 = arith.constant 0 : index
    %c0_4 = arith.constant 0 : index
    %3 = vector.load %arg3[%c0_3, %c0_4] : memref<64x1xf32, #tpu.memory_space<vmem>>, vector<64x1xf32>
    %4 = vector.broadcast %3 : vector<64x1xf32> to vector<64x256xf32>
    %5 = arith.addf %2, %4 : vector<64x256xf32>
    %6 = math.tanh %5 : vector<64x256xf32>
    %c0_5 = arith.constant 0 : index
    %c0_6 = arith.constant 0 : index
    %7 = vector.load %arg4[%c0_5, %c0_6] : memref<64x64xf32, #tpu.memory_space<vmem>>, vector<64x64xf32>
    %cst_7 = arith.constant dense<0.000000e+00> : vector<64x256xf32>
    %8 = tpu.matmul %7, %6, %cst_7 {dimension_numbers = #tpu.dot_dimension_numbers<[1], [0], [0], [1], [0, 0, 1, 1], [], []>} : vector<64x64xf32>, vector<64x256xf32>, vector<64x256xf32> -> vector<64x256xf32>
    %c0_8 = arith.constant 0 : index
    %c0_9 = arith.constant 0 : index
    %9 = vector.load %arg5[%c0_8, %c0_9] : memref<64x1xf32, #tpu.memory_space<vmem>>, vector<64x1xf32>
    %10 = vector.broadcast %9 : vector<64x1xf32> to vector<64x256xf32>
    %11 = arith.addf %8, %10 : vector<64x256xf32>
    %12 = math.tanh %11 : vector<64x256xf32>
    %c0_10 = arith.constant 0 : index
    %c0_11 = arith.constant 0 : index
    %13 = vector.load %arg6[%c0_10, %c0_11] : memref<32x64xf32, #tpu.memory_space<vmem>>, vector<32x64xf32>
    %cst_12 = arith.constant dense<0.000000e+00> : vector<256x32xf32>
    %14 = tpu.matmul %12, %13, %cst_12 {dimension_numbers = #tpu.dot_dimension_numbers<[0], [1], [1], [0], [0, 1, 1, 0], [], []>} : vector<64x256xf32>, vector<32x64xf32>, vector<256x32xf32> -> vector<256x32xf32>
    %c0_13 = arith.constant 0 : index
    %c0_14 = arith.constant 0 : index
    %15 = vector.load %arg7[%c0_13, %c0_14] : memref<1x32xf32, #tpu.memory_space<vmem>>, vector<1x32xf32>
    %16 = vector.broadcast %15 : vector<1x32xf32> to vector<256x32xf32>
    %17 = arith.addf %14, %16 : vector<256x32xf32>
    %c0_15 = arith.constant 0 : index
    %c0_16 = arith.constant 0 : index
    %18 = vector.load %arg8[%c0_15, %c0_16] : memref<256x32xf32, #tpu.memory_space<vmem>>, vector<256x32xf32>
    tpu.vector_store %arg8[%c0_15, %c0_16], %17 {strides = array<i32>} : memref<256x32xf32, #tpu.memory_space<vmem>>, vector<256x32xf32>,
    return
  }
  func.func @transform_0(%arg0: i32) -> (i32, i32) {
    %c0_i32 = arith.constant 0 : i32
    %c0_i32_0 = arith.constant 0 : i32
    return %arg0, %c0_i32 : i32, i32
  }
  func.func @transform_1(%arg0: i32) -> (i32, i32) {
    %c0_i32 = arith.constant 0 : i32
    %c0_i32_0 = arith.constant 0 : i32
    %c0_i32_1 = arith.constant 0 : i32
    return %c0_i32, %c0_i32_0 : i32, i32
  }
  func.func @transform_2(%arg0: i32) -> (i32, i32) {
    %c0_i32 = arith.constant 0 : i32
    %c0_i32_0 = arith.constant 0 : i32
    %c0_i32_1 = arith.constant 0 : i32
    return %c0_i32, %c0_i32_0 : i32, i32
  }
  func.func @transform_3(%arg0: i32) -> (i32, i32) {
    %c0_i32 = arith.constant 0 : i32
    %c0_i32_0 = arith.constant 0 : i32
    %c0_i32_1 = arith.constant 0 : i32
    return %c0_i32, %c0_i32_0 : i32, i32
  }
  func.func @transform_4(%arg0: i32) -> (i32, i32) {
    %c0_i32 = arith.constant 0 : i32
    %c0_i32_0 = arith.constant 0 : i32
    %c0_i32_1 = arith.constant 0 : i32
    return %c0_i32, %c0_i32_0 : i32, i32
  }
  func.func @transform_5(%arg0: i32) -> (i32, i32) {
    %c0_i32 = arith.constant 0 : i32
    %c0_i32_0 = arith.constant 0 : i32
    %c0_i32_1 = arith.constant 0 : i32
    return %c0_i32, %c0_i32_0 : i32, i32
  }
  func.func @transform_6(%arg0: i32) -> (i32, i32) {
    %c0_i32 = arith.constant 0 : i32
    %c0_i32_0 = arith.constant 0 : i32
    %c0_i32_1 = arith.constant 0 : i32
    return %c0_i32, %c0_i32_0 : i32, i32
  }
  func.func @transform_7(%arg0: i32) -> (i32, i32) {
    %c0_i32 = arith.constant 0 : i32
    %c0_i32_0 = arith.constant 0 : i32
    return %arg0, %c0_i32 : i32, i32
  }
}

</mosaic_0001>

<llo_original>
// kernel: ode_function.1
$region0: #{ode_function.1}
  #allocation0 [shape = 'u32[]', space=smem, size = 0x4, offset = 0x4, fixed_abs, tag = 'smem constant byte address 0x4 - core index']
  #allocation1 [shape = 'u32[144,128]{1,0:T(1,128)}', space=vmem, size = 0x12000, scoped, tag = 'internal scratch']
  %s0 = inlined_call_operand.vmem [shape: f32[512,32], index: 0, kind: input, shape index: {}]
  %s1 = inlined_call_operand.vmem [shape: f32[64,32], index: 1, kind: input, shape index: {}]
  %s2 = inlined_call_operand.vmem [shape: f32[64,1], index: 2, kind: input, shape index: {}]
  %s3 = inlined_call_operand.vmem [shape: f32[64,64], index: 3, kind: input, shape index: {}]
  %s4 = inlined_call_operand.vmem [shape: f32[64,1], index: 4, kind: input, shape index: {}]
  %s5 = inlined_call_operand.vmem [shape: f32[32,64], index: 5, kind: input, shape index: {}]
  %s6 = inlined_call_operand.vmem [shape: f32[1,32], index: 6, kind: input, shape index: {}]
  %s7 = inlined_call_operand.vmem [shape: f32[512,32], index: 7, kind: output, shape index: {}]
  %s8 = sld [smem:[#allocation0]]
  $region61: #{ode_function.1} parent=0
    _
  %s10 = ssub.s32 1, %s8
  %s11 = scalar_select 0, %s10, %s8
  loop: start=0, step=1, limit=4
  $region2: #{ode_function.1} parent=0 // loop_pre_header
    _
  $region3: #{ode_function.1} parent=0 // loop_header
    %s13 = sphi 0, %s17
    %p14 = scmp.ge.s32.totalorder %s13, 4
    %s23 = sphi 0, %s25
    %s26 = sphi 0, %s23
    %s27 = sphi 0, %s26
    %s43 = sphi 0, %s27
    %s47 = sphi 0, %s47
    %s49 = sphi 0, %s47
    %s50 = sphi 0, %s49
    %s64 = sphi 0, %s50
    %s68 = sphi 0, %s68
    %s70 = sphi 0, %s68
    %s71 = sphi 0, %s70
    %s85 = sphi 0, %s71
    %s89 = sphi 0, %s89
    %s91 = sphi 0, %s89
    %s92 = sphi 0, %s91
    %s106 = sphi 0, %s92
    %s110 = sphi 0, %s110
    %s112 = sphi 0, %s110
    %s113 = sphi 0, %s112
    %s127 = sphi 0, %s113
    %s131 = sphi 0, %s131
    %s133 = sphi 0, %s131
    %s134 = sphi 0, %s133
    %s148 = sphi 0, %s134
    %s152 = sphi 0, %s152
    %s154 = sphi 0, %s152
    %s155 = sphi 0, %s154
    %s169 = sphi 0, %s155
    %s175 = sphi 0, %s177
    %s178 = sphi 0, %s175
    %s179 = sphi 0, %s178
    %s195 = sphi 0, %s179
  $region4: #{ode_function.1} parent=0 // loop_header_branch
    %16 = sbr.rel (%p14) target = $region8
  $region5: #{ode_function.1} parent=0 // loop_body
    %s18 = ssub.s32 %s13, 1
    %s19 = ssub.s32 %s13, 2
    %s20 = sadd.s32 %s13, 1
    %s21 = ssub.s32 %s13, %s20
    %p22 = scmp.eq.s32.totalorder %s21, 0
    %s24 = sadd.s32 %s23, 1
    %s25 = scalar_select %p22, %s23, %s24
    %p28 = pneg %p22
    %p29 = scmp.eq.s32.totalorder %s13, 1
    %p30 = por %p28, %p29
    %p31 = scmp.ne.s32.totalorder %s23, %s26
    %p32 = scmp.eq.s32.totalorder %s13, 0
    %p33 = por %p31, %p32
    %p34 = scmp.ne.s32.totalorder %s23, %s26
    %p35 = scmp.eq.s32.totalorder %s18, 1
    %p36 = por %p34, %p35
    %p37 = scmp.ne.s32.totalorder %s26, %s27
    %p38 = scmp.eq.s32.totalorder %s18, 0
    %p39 = por %p37, %p38
    %p40 = scmp.ne.s32.totalorder %s26, %s27
    %p41 = scmp.eq.s32.totalorder %s19, 1
    %p42 = por %p40, %p41
    %p44 = scmp.ne.s32.totalorder %s27, %s43
    %p45 = scmp.eq.s32.totalorder %s19, 0
    %p46 = por %p44, %p45
    %s48 = sadd.s32 %s47, 1
    %p51 = scmp.eq.s32.totalorder %s13, 1
    %p52 = scmp.ne.s32.totalorder %s47, %s49
    %p53 = scmp.eq.s32.totalorder %s13, 0
    %p54 = por %p52, %p53
    %p55 = scmp.ne.s32.totalorder %s47, %s49
    %p56 = scmp.eq.s32.totalorder %s18, 1
    %p57 = por %p55, %p56
    %p58 = scmp.ne.s32.totalorder %s49, %s50
    %p59 = scmp.eq.s32.totalorder %s18, 0
    %p60 = por %p58, %p59
    %p61 = scmp.ne.s32.totalorder %s49, %s50
    %p62 = scmp.eq.s32.totalorder %s19, 1
    %p63 = por %p61, %p62
    %p65 = scmp.ne.s32.totalorder %s50, %s64
    %p66 = scmp.eq.s32.totalorder %s19, 0
    %p67 = por %p65, %p66
    %s69 = sadd.s32 %s68, 1
    %p72 = scmp.eq.s32.totalorder %s13, 1
    %p73 = scmp.ne.s32.totalorder %s68, %s70
    %p74 = scmp.eq.s32.totalorder %s13, 0
    %p75 = por %p73, %p74
    %p76 = scmp.ne.s32.totalorder %s68, %s70
    %p77 = scmp.eq.s32.totalorder %s18, 1
    %p78 = por %p76, %p77
    %p79 = scmp.ne.s32.totalorder %s70, %s71
    %p80 = scmp.eq.s32.totalorder %s18, 0
    %p81 = por %p79, %p80
    %p82 = scmp.ne.s32.totalorder %s70, %s71
    %p83 = scmp.eq.s32.totalorder %s19, 1
    %p84 = por %p82, %p83
    %p86 = scmp.ne.s32.totalorder %s71, %s85
    %p87 = scmp.eq.s32.totalorder %s19, 0
    %p88 = por %p86, %p87
    %s90 = sadd.s32 %s89, 1
    %p93 = scmp.eq.s32.totalorder %s13, 1
    %p94 = scmp.ne.s32.totalorder %s89, %s91
    %p95 = scmp.eq.s32.totalorder %s13, 0
    %p96 = por %p94, %p95
    %p97 = scmp.ne.s32.totalorder %s89, %s91
    %p98 = scmp.eq.s32.totalorder %s18, 1
    %p99 = por %p97, %p98
    %p100 = scmp.ne.s32.totalorder %s91, %s92
    %p101 = scmp.eq.s32.totalorder %s18, 0
    %p102 = por %p100, %p101
    %p103 = scmp.ne.s32.totalorder %s91, %s92
    %p104 = scmp.eq.s32.totalorder %s19, 1
    %p105 = por %p103, %p104
    %p107 = scmp.ne.s32.totalorder %s92, %s106
    %p108 = scmp.eq.s32.totalorder %s19, 0
    %p109 = por %p107, %p108
    %s111 = sadd.s32 %s110, 1
    %p114 = scmp.eq.s32.totalorder %s13, 1
    %p115 = scmp.ne.s32.totalorder %s110, %s112
    %p116 = scmp.eq.s32.totalorder %s13, 0
    %p117 = por %p115, %p116
    %p118 = scmp.ne.s32.totalorder %s110, %s112
    %p119 = scmp.eq.s32.totalorder %s18, 1
    %p120 = por %p118, %p119
    %p121 = scmp.ne.s32.totalorder %s112, %s113
    %p122 = scmp.eq.s32.totalorder %s18, 0
    %p123 = por %p121, %p122
    %p124 = scmp.ne.s32.totalorder %s112, %s113
    %p125 = scmp.eq.s32.totalorder %s19, 1
    %p126 = por %p124, %p125
    %p128 = scmp.ne.s32.totalorder %s113, %s127
    %p129 = scmp.eq.s32.totalorder %s19, 0
    %p130 = por %p128, %p129
    %s132 = sadd.s32 %s131, 1
    %p135 = scmp.eq.s32.totalorder %s13, 1
    %p136 = scmp.ne.s32.totalorder %s131, %s133
    %p137 = scmp.eq.s32.totalorder %s13, 0
    %p138 = por %p136, %p137
    %p139 = scmp.ne.s32.totalorder %s131, %s133
    %p140 = scmp.eq.s32.totalorder %s18, 1
    %p141 = por %p139, %p140
    %p142 = scmp.ne.s32.totalorder %s133, %s134
    %p143 = scmp.eq.s32.totalorder %s18, 0
    %p144 = por %p142, %p143
    %p145 = scmp.ne.s32.totalorder %s133, %s134
    %p146 = scmp.eq.s32.totalorder %s19, 1
    %p147 = por %p145, %p146
    %p149 = scmp.ne.s32.totalorder %s134, %s148
    %p150 = scmp.eq.s32.totalorder %s19, 0
    %p151 = por %p149, %p150
    %s153 = sadd.s32 %s152, 1
    %p156 = scmp.eq.s32.totalorder %s13, 1
    %p157 = scmp.ne.s32.totalorder %s152, %s154
    %p158 = scmp.eq.s32.totalorder %s13, 0
    %p159 = por %p157, %p158
    %p160 = scmp.ne.s32.totalorder %s152, %s154
    %p161 = scmp.eq.s32.totalorder %s18, 1
    %p162 = por %p160, %p161
    %p163 = scmp.ne.s32.totalorder %s154, %s155
    %p164 = scmp.eq.s32.totalorder %s18, 0
    %p165 = por %p163, %p164
    %p166 = scmp.ne.s32.totalorder %s154, %s155
    %p167 = scmp.eq.s32.totalorder %s19, 1
    %p168 = por %p166, %p167
    %p170 = scmp.ne.s32.totalorder %s155, %s169
    %p171 = scmp.eq.s32.totalorder %s19, 0
    %p172 = por %p170, %p171
    %s173 = ssub.s32 %s13, %s20
    %p174 = scmp.eq.s32.totalorder %s173, 0
    %s176 = sadd.s32 %s175, 1
    %s177 = scalar_select %p174, %s175, %s176
    %p180 = pneg %p174
    %p181 = scmp.eq.s32.totalorder %s13, 1
    %p182 = por %p180, %p181
    %p183 = scmp.ne.s32.totalorder %s175, %s178
    %p184 = scmp.eq.s32.totalorder %s13, 0
    %p185 = por %p183, %p184
    %p186 = scmp.ne.s32.totalorder %s175, %s178
    %p187 = scmp.eq.s32.totalorder %s18, 1
    %p188 = por %p186, %p187
    %p189 = scmp.ne.s32.totalorder %s178, %s179
    %p190 = scmp.eq.s32.totalorder %s18, 0
    %p191 = por %p189, %p190
    %p192 = scmp.ne.s32.totalorder %s178, %s179
    %p193 = scmp.eq.s32.totalorder %s19, 1
    %p194 = por %p192, %p193
    %p196 = scmp.ne.s32.totalorder %s179, %s195
    %p197 = scmp.eq.s32.totalorder %s19, 0
    %p198 = por %p196, %p197
    %p199 = scmp.le.s32.totalorder 1, %s13
    %p200 = scmp.lt.s32.totalorder %s13, 3
    %p201 = pnand %p199, %p200
    %p202 = pneg %p201
    // Predicated region
    $region9: #{ode_function.1} parent=5 // pred_check
      _
    $region10: #{ode_function.1} parent=5 // pred_check_branch
      %204 = sbr.rel (%p201) target = $region12
    $region11: #{ode_function.1} parent=5 // pred_region
      %s205 = ssub.s32 %s13, 1
      // Predicated region
      $region13: #{ode_function.1} parent=11 // pred_check
        %p206 = pneg %p60
      $region14: #{ode_function.1} parent=11 // pred_check_branch
        %208 = sbr.rel (%p206) target = $region16
      $region15: #{ode_function.1} parent=11 // pred_region
        _
      $region16: #{ode_function.1} parent=11 // pred_fallthru
        _
      // Predicated region
      $region17: #{ode_function.1} parent=11 // pred_check
        %p209 = pneg %p81
      $region18: #{ode_function.1} parent=11 // pred_check_branch
        %211 = sbr.rel (%p209) target = $region20
      $region19: #{ode_function.1} parent=11 // pred_region
        _
      $region20: #{ode_function.1} parent=11 // pred_fallthru
        _
      // Predicated region
      $region21: #{ode_function.1} parent=11 // pred_check
        %p212 = pneg %p102
      $region22: #{ode_function.1} parent=11 // pred_check_branch
        %214 = sbr.rel (%p212) target = $region24
      $region23: #{ode_function.1} parent=11 // pred_region
        _
      $region24: #{ode_function.1} parent=11 // pred_fallthru
        _
      // Predicated region
      $region25: #{ode_function.1} parent=11 // pred_check
        %p215 = pneg %p123
      $region26: #{ode_function.1} parent=11 // pred_check_branch
        %217 = sbr.rel (%p215) target = $region28
      $region27: #{ode_function.1} parent=11 // pred_region
        _
      $region28: #{ode_function.1} parent=11 // pred_fallthru
        _
      // Predicated region
      $region29: #{ode_function.1} parent=11 // pred_check
        %p218 = pneg %p144
      $region30: #{ode_function.1} parent=11 // pred_check_branch
        %220 = sbr.rel (%p218) target = $region32
      $region31: #{ode_function.1} parent=11 // pred_region
        _
      $region32: #{ode_function.1} parent=11 // pred_fallthru
        _
      // Predicated region
      $region33: #{ode_function.1} parent=11 // pred_check
        %p221 = pneg %p165
      $region34: #{ode_function.1} parent=11 // pred_check_branch
        %223 = sbr.rel (%p221) target = $region36
      $region35: #{ode_function.1} parent=11 // pred_region
        _
      $region36: #{ode_function.1} parent=11 // pred_fallthru
        _
    $region12: #{ode_function.1} parent=5 // pred_fallthru
      _
    %p224 = scmp.lt.s32.totalorder %s13, 2
    // Predicated region
    $region37: #{ode_function.1} parent=5 // pred_check
      %p225 = pneg %p224
    $region38: #{ode_function.1} parent=5 // pred_check_branch
      %227 = sbr.rel (%p225) target = $region40
    $region39: #{ode_function.1} parent=5 // pred_region
      // Predicated region
      $region41: #{ode_function.1} parent=39 // pred_check
        %p228 = pneg %p33
      $region42: #{ode_function.1} parent=39 // pred_check_branch
        %230 = sbr.rel (%p228) target = $region44
      $region43: #{ode_function.1} parent=39 // pred_region
        %s231 = smul.u32 32, %s13
        %p232 = scmp.lt.s32.totalorder %s231, 63
        %s233 = scalar_select %p232, %s231, 63
        %s234 = smul.addr %s233, 8
        %s235 = scalar_lea.vmem %s0, %s234
        %s236 = smul.u32 32, %s13
      $region44: #{ode_function.1} parent=39 // pred_fallthru
        _
    $region40: #{ode_function.1} parent=5 // pred_fallthru
      _
    %p237 = scmp.le.s32.totalorder 1, %s13
    %p238 = scmp.lt.s32.totalorder %s13, 3
    %p239 = pnand %p237, %p238
    %p240 = pneg %p239
    // Predicated region
    $region45: #{ode_function.1} parent=5 // pred_check
      _
    $region46: #{ode_function.1} parent=5 // pred_check_branch
      %242 = sbr.rel (%p239) target = $region48
    $region47: #{ode_function.1} parent=5 // pred_region
      %s243 = ssub.s32 %s13, 1
      %s244 = smul.u32 32, %s18
      %p245 = scmp.lt.s32.totalorder %s244, 63
      %s246 = scalar_select %p245, %s244, 63
      %s247 = smul.addr %s246, 8
      %s248 = scalar_lea.vmem %s0, %s247
      %p249 = pneg %p39
      %p250 = pneg %p36
      %p251 = pneg %p60
      %p252 = pneg %p57
      %p253 = pneg %p81
      %p254 = pneg %p78
      %p255 = pneg %p102
      %p256 = pneg %p99
      %p257 = pneg %p123
      %p258 = pneg %p120
      %p259 = pneg %p144
      %p260 = pneg %p141
      %p261 = pneg %p165
      %p262 = pneg %p162
      %p263 = pneg %p191
      %p264 = pneg %p188
      %s265 = smul.u32 32, %s18
      %p266 = scmp.lt.s32.totalorder %s265, 63
      %s267 = scalar_select %p266, %s265, 63
      %s268 = smul.addr %s267, 8
      %s269 = scalar_lea.vmem %s7, %s268
      %s270 = smul.u32 32, %s18
      %p271 = scmp.lt.s32.totalorder %s270, 63
      %s272 = scalar_select %p271, %s270, 63
      %s273 = smul.addr %s272, 8
      %s274 = scalar_lea.vmem %s0, %s273
      %s275 = smul.u32 32, %s18
      %s276 = smul.u32 32, %s18
      %p277 = scmp.lt.s32.totalorder %s276, 63
      %s278 = scalar_select %p277, %s276, 63
      %s279 = smul.addr %s278, 8
      %s280 = scalar_lea.vmem %s7, %s279
      %s281 = smul.u32 32, %s18
      %v282 = vld [vmem:[%s274] sm:$0xff]
      %v283 = vld [vmem:[%s274 + $0x8] sm:$0xff]
      %v284 = vld [vmem:[%s274 + $0x10] sm:$0xff]
      %v285 = vld [vmem:[%s274 + $0x18] sm:$0xff]
      %v286 = vld [vmem:[%s274 + $0x20] sm:$0xff]
      %v287 = vld [vmem:[%s274 + $0x28] sm:$0xff]
      %v288 = vld [vmem:[%s274 + $0x30] sm:$0xff]
      %v289 = vld [vmem:[%s274 + $0x38] sm:$0xff]
      %v290 = vld [vmem:[%s274 + $0x40] sm:$0xff]
      %v291 = vld [vmem:[%s274 + $0x48] sm:$0xff]
      %v292 = vld [vmem:[%s274 + $0x50] sm:$0xff]
      %v293 = vld [vmem:[%s274 + $0x58] sm:$0xff]
      %v294 = vld [vmem:[%s274 + $0x60] sm:$0xff]
      %v295 = vld [vmem:[%s274 + $0x68] sm:$0xff]
      %v296 = vld [vmem:[%s274 + $0x70] sm:$0xff]
      %v297 = vld [vmem:[%s274 + $0x78] sm:$0xff]
      %v298 = vld [vmem:[%s274 + $0x80] sm:$0xff]
      %v299 = vld [vmem:[%s274 + $0x88] sm:$0xff]
      %v300 = vld [vmem:[%s274 + $0x90] sm:$0xff]
      %v301 = vld [vmem:[%s274 + $0x98] sm:$0xff]
      %v302 = vld [vmem:[%s274 + $0xa0] sm:$0xff]
      %v303 = vld [vmem:[%s274 + $0xa8] sm:$0xff]
      %v304 = vld [vmem:[%s274 + $0xb0] sm:$0xff]
      %v305 = vld [vmem:[%s274 + $0xb8] sm:$0xff]
      %v306 = vld [vmem:[%s274 + $0xc0] sm:$0xff]
      %v307 = vld [vmem:[%s274 + $0xc8] sm:$0xff]
      %v308 = vld [vmem:[%s274 + $0xd0] sm:$0xff]
      %v309 = vld [vmem:[%s274 + $0xd8] sm:$0xff]
      %v310 = vld [vmem:[%s274 + $0xe0] sm:$0xff]
      %v311 = vld [vmem:[%s274 + $0xe8] sm:$0xff]
      %v312 = vld [vmem:[%s274 + $0xf0] sm:$0xff]
      %v313 = vld [vmem:[%s274 + $0xf8] sm:$0xff]
      %v314 = vld [vmem:[%s1] sm:$0xff]
      %v315 = vld [vmem:[%s1 + $0x8] sm:$0xff]
      %v316 = vld [vmem:[%s1 + $0x10] sm:$0xff]
      %v317 = vld [vmem:[%s1 + $0x18] sm:$0xff]
      %v318 = vld [vmem:[%s1 + $0x20] sm:$0xff]
      %v319 = vld [vmem:[%s1 + $0x28] sm:$0xff]
      %v320 = vld [vmem:[%s1 + $0x30] sm:$0xff]
      %v321 = vld [vmem:[%s1 + $0x38] sm:$0xff]
      %v322 = vld [vmem:[%s2] sm:$0xff]
      %v323 = vld [vmem:[%s2 + $0x8] sm:$0xff]
      %v324 = vld [vmem:[%s2 + $0x10] sm:$0xff]
      %v325 = vld [vmem:[%s2 + $0x18] sm:$0xff]
      %v326 = vld [vmem:[%s2 + $0x20] sm:$0xff]
      %v327 = vld [vmem:[%s2 + $0x28] sm:$0xff]
      %v328 = vld [vmem:[%s2 + $0x30] sm:$0xff]
      %v329 = vld [vmem:[%s2 + $0x38] sm:$0xff]
      %331 = vset.pattern.permute.xlu0 0
      %332 = vperm.xlu0 %331, %v322
      %v333 = vpop.permute.xlu0 %332
      %336 = vset.pattern.permute.xlu0 0
      %337 = vperm.xlu0 %336, %v323
      %v338 = vpop.permute.xlu0 %337
      %341 = vset.pattern.permute.xlu0 0
      %342 = vperm.xlu0 %341, %v324
      %v343 = vpop.permute.xlu0 %342
      %346 = vset.pattern.permute.xlu0 0
      %347 = vperm.xlu0 %346, %v325
      %v348 = vpop.permute.xlu0 %347
      %351 = vset.pattern.permute.xlu0 0
      %352 = vperm.xlu0 %351, %v326
      %v353 = vpop.permute.xlu0 %352
      %356 = vset.pattern.permute.xlu0 0
      %357 = vperm.xlu0 %356, %v327
      %v358 = vpop.permute.xlu0 %357
      %361 = vset.pattern.permute.xlu0 0
      %362 = vperm.xlu0 %361, %v328
      %v363 = vpop.permute.xlu0 %362
      %366 = vset.pattern.permute.xlu0 0
      %367 = vperm.xlu0 %366, %v329
      %v368 = vpop.permute.xlu0 %367
      %vm370 = vcmask 261120
      %v372 = vsel %vm370, %v314, 0
      %v375 = vsel %vm370, %v315, 0
      %v378 = vsel %vm370, %v316, 0
      %v381 = vsel %vm370, %v317, 0
      %v384 = vsel %vm370, %v318, 0
      %v387 = vsel %vm370, %v319, 0
      %v390 = vsel %vm370, %v320, 0
      %v393 = vsel %vm370, %v321, 0
      %v396 = vsel %vm370, %v282, 0
      %v399 = vsel %vm370, %v283, 0
      %v402 = vsel %vm370, %v284, 0
      %v405 = vsel %vm370, %v285, 0
      %v408 = vsel %vm370, %v286, 0
      %v411 = vsel %vm370, %v287, 0
      %v414 = vsel %vm370, %v288, 0
      %v417 = vsel %vm370, %v289, 0
      %v420 = vsel %vm370, %v290, 0
      %v423 = vsel %vm370, %v291, 0
      %v426 = vsel %vm370, %v292, 0
      %v429 = vsel %vm370, %v293, 0
      %v432 = vsel %vm370, %v294, 0
      %v435 = vsel %vm370, %v295, 0
      %v438 = vsel %vm370, %v296, 0
      %v441 = vsel %vm370, %v297, 0
      %v444 = vsel %vm370, %v298, 0
      %v447 = vsel %vm370, %v299, 0
      %v450 = vsel %vm370, %v300, 0
      %v453 = vsel %vm370, %v301, 0
      %v456 = vsel %vm370, %v302, 0
      %v459 = vsel %vm370, %v303, 0
      %v462 = vsel %vm370, %v304, 0
      %v465 = vsel %vm370, %v305, 0
      %v468 = vsel %vm370, %v306, 0
      %v471 = vsel %vm370, %v307, 0
      %v474 = vsel %vm370, %v308, 0
      %v477 = vsel %vm370, %v309, 0
      %v480 = vsel %vm370, %v310, 0
      %v483 = vsel %vm370, %v311, 0
      %v486 = vsel %vm370, %v312, 0
      %v489 = vsel %vm370, %v313, 0
      %491 = vmatprep.subr.mxu0 0.0
      %492 = vmatpush1.xpose.msra.mxu0 %v396
      %493 = vmatprep.subr.mxu0 0.0
      %494 = vmatpush1.xpose.msra.mxu0 %v399
      %495 = vmatprep.subr.mxu0 0.0
      %496 = vmatpush1.xpose.msra.mxu0 %v402
      %497 = vmatprep.subr.mxu0 0.0
      %498 = vmatpush1.xpose.msra.mxu0 %v405
      %499 = vmatprep.subr.mxu0 0.0
      %500 = vmatpush1.xpose.msra.mxu0 %v408
      %501 = vmatprep.subr.mxu0 0.0
      %502 = vmatpush1.xpose.msra.mxu0 %v411
      %503 = vmatprep.subr.mxu0 0.0
      %504 = vmatpush1.xpose.msra.mxu0 %v414
      %505 = vmatprep.subr.mxu0 0.0
      %506 = vmatpush1.xpose.msra.mxu0 %v417
      %507 = vmatprep.subr.mxu0 0.0
      %508 = vmatpush1.xpose.msra.mxu0 %v420
      %509 = vmatprep.subr.mxu0 0.0
      %510 = vmatpush1.xpose.msra.mxu0 %v423
      %511 = vmatprep.subr.mxu0 0.0
      %512 = vmatpush1.xpose.msra.mxu0 %v426
      %513 = vmatprep.subr.mxu0 0.0
      %514 = vmatpush1.xpose.msra.mxu0 %v429
      %515 = vmatprep.subr.mxu0 0.0
      %516 = vmatpush1.xpose.msra.mxu0 %v432
      %517 = vmatprep.subr.mxu0 0.0
      %518 = vmatpush1.xpose.msra.mxu0 %v435
      %519 = vmatprep.subr.mxu0 0.0
      %520 = vmatpush1.xpose.msra.mxu0 %v438
      %521 = vmatprep.subr.mxu0 0.0
      %522 = vmatpush1.xpose.msra.mxu0 %v441
      %523 = vmatprep.subr.mxu0 0.0
      %524 = vmatpush1.xpose.msra.mxu0 %v444
      %525 = vmatprep.subr.mxu0 0.0
      %526 = vmatpush1.xpose.msra.mxu0 %v447
      %527 = vmatprep.subr.mxu0 0.0
      %528 = vmatpush1.xpose.msra.mxu0 %v450
      %529 = vmatprep.subr.mxu0 0.0
      %530 = vmatpush1.xpose.msra.mxu0 %v453
      %531 = vmatprep.subr.mxu0 0.0
      %532 = vmatpush1.xpose.msra.mxu0 %v456
      %533 = vmatprep.subr.mxu0 0.0
      %534 = vmatpush1.xpose.msra.mxu0 %v459
      %535 = vmatprep.subr.mxu0 0.0
      %536 = vmatpush1.xpose.msra.mxu0 %v462
      %537 = vmatprep.subr.mxu0 0.0
      %538 = vmatpush1.xpose.msra.mxu0 %v465
      %539 = vmatprep.subr.mxu0 0.0
      %540 = vmatpush1.xpose.msra.mxu0 %v468
      %541 = vmatprep.subr.mxu0 0.0
      %542 = vmatpush1.xpose.msra.mxu0 %v471
      %543 = vmatprep.subr.mxu0 0.0
      %544 = vmatpush1.xpose.msra.mxu0 %v474
      %545 = vmatprep.subr.mxu0 0.0
      %546 = vmatpush1.xpose.msra.mxu0 %v477
      %547 = vmatprep.subr.mxu0 0.0
      %548 = vmatpush1.xpose.msra.mxu0 %v480
      %549 = vmatprep.subr.mxu0 0.0
      %550 = vmatpush1.xpose.msra.mxu0 %v483
      %551 = vmatprep.subr.mxu0 0.0
      %552 = vmatpush1.xpose.msra.mxu0 %v486
      %553 = vmatprep.subr.mxu0 0.0
      %554 = vmatpush1.xpose.msra.mxu0 %v489
      %555 = vmatprep.mubr.f32.mxu0 0.0
      %556 = vmatmul.mubr.f32.gmra.mrb[0].mxu0 %v372
      %v557 = vpop.f32.mrb[0].mxu0
      %v558 = vadd.f32 %v333, %v557
      %v559 = vpop.f32.mrb[0].mxu0
      %v560 = vadd.f32 %v333, %v559
      %561 = vmatprep.mubr.f32.mxu0 0.0
      %562 = vmatmul.mubr.f32.gmra.mrb[0].mxu0 %v375
      %v563 = vpop.f32.mrb[0].mxu0
      %v564 = vadd.f32 %v338, %v563
      %v565 = vpop.f32.mrb[0].mxu0
      %v566 = vadd.f32 %v338, %v565
      %567 = vmatprep.mubr.f32.mxu0 0.0
      %568 = vmatmul.mubr.f32.gmra.mrb[0].mxu0 %v378
      %v569 = vpop.f32.mrb[0].mxu0
      %v570 = vadd.f32 %v343, %v569
      %v571 = vpop.f32.mrb[0].mxu0
      %v572 = vadd.f32 %v343, %v571
      %573 = vmatprep.mubr.f32.mxu0 0.0
      %574 = vmatmul.mubr.f32.gmra.mrb[0].mxu0 %v381
      %v575 = vpop.f32.mrb[0].mxu0
      %v576 = vadd.f32 %v348, %v575
      %v577 = vpop.f32.mrb[0].mxu0
      %v578 = vadd.f32 %v348, %v577
      %579 = vmatprep.mubr.f32.mxu0 0.0
      %580 = vmatmul.mubr.f32.gmra.mrb[0].mxu0 %v384
      %v581 = vpop.f32.mrb[0].mxu0
      %v582 = vadd.f32 %v353, %v581
      %v583 = vpop.f32.mrb[0].mxu0
      %v584 = vadd.f32 %v353, %v583
      %585 = vmatprep.mubr.f32.mxu0 0.0
      %586 = vmatmul.mubr.f32.gmra.mrb[0].mxu0 %v387
      %v587 = vpop.f32.mrb[0].mxu0
      %v588 = vadd.f32 %v358, %v587
      %v589 = vpop.f32.mrb[0].mxu0
      %v590 = vadd.f32 %v358, %v589
      %591 = vmatprep.mubr.f32.mxu0 0.0
      %592 = vmatmul.mubr.f32.gmra.mrb[0].mxu0 %v390
      %v593 = vpop.f32.mrb[0].mxu0
      %v594 = vadd.f32 %v363, %v593
      %v595 = vpop.f32.mrb[0].mxu0
      %v596 = vadd.f32 %v363, %v595
      %597 = vmatprep.mubr.f32.mxu0 0.0
      %598 = vmatmul.mubr.f32.gmra.mrb[0].mxu0 %v393
      %v599 = vpop.f32.mrb[0].mxu0
      %v600 = vadd.f32 %v368, %v599
      %v601 = vpop.f32.mrb[0].mxu0
      %v602 = vadd.f32 %v368, %v601
      %603 = vdwg.mxu0
      %v604 = vtanh.pop %v558
      %v605 = vtanh.pop %v560
      %v606 = vtanh.pop %v564
      %v607 = vtanh.pop %v566
      %v608 = vtanh.pop %v570
      %v609 = vtanh.pop %v572
      %v610 = vtanh.pop %v576
      %v611 = vtanh.pop %v578
      %v612 = vtanh.pop %v582
      %v613 = vtanh.pop %v584
      %v614 = vtanh.pop %v588
      %v615 = vtanh.pop %v590
      %v616 = vtanh.pop %v594
      %v617 = vtanh.pop %v596
      %v618 = vtanh.pop %v600
      %v619 = vtanh.pop %v602
      %v620 = vld [vmem:[%s3] sm:$0xff]
      %v621 = vld [vmem:[%s3 + $0x8] sm:$0xff]
      %v622 = vld [vmem:[%s3 + $0x10] sm:$0xff]
      %v623 = vld [vmem:[%s3 + $0x18] sm:$0xff]
      %v624 = vld [vmem:[%s3 + $0x20] sm:$0xff]
      %v625 = vld [vmem:[%s3 + $0x28] sm:$0xff]
      %v626 = vld [vmem:[%s3 + $0x30] sm:$0xff]
      %v627 = vld [vmem:[%s3 + $0x38] sm:$0xff]
      %v628 = vld [vmem:[%s4] sm:$0xff]
      %v629 = vld [vmem:[%s4 + $0x8] sm:$0xff]
      %v630 = vld [vmem:[%s4 + $0x10] sm:$0xff]
      %v631 = vld [vmem:[%s4 + $0x18] sm:$0xff]
      %v632 = vld [vmem:[%s4 + $0x20] sm:$0xff]
      %v633 = vld [vmem:[%s4 + $0x28] sm:$0xff]
      %v634 = vld [vmem:[%s4 + $0x30] sm:$0xff]
      %v635 = vld [vmem:[%s4 + $0x38] sm:$0xff]
      %637 = vset.pattern.permute.xlu0 0
      %638 = vperm.xlu0 %637, %v628
      %v639 = vpop.permute.xlu0 %638
      %642 = vset.pattern.permute.xlu0 0
      %643 = vperm.xlu0 %642, %v629
      %v644 = vpop.permute.xlu0 %643
      %647 = vset.pattern.permute.xlu0 0
      %648 = vperm.xlu0 %647, %v630
      %v649 = vpop.permute.xlu0 %648
      %652 = vset.pattern.permute.xlu0 0
      %653 = vperm.xlu0 %652, %v631
      %v654 = vpop.permute.xlu0 %653
      %657 = vset.pattern.permute.xlu0 0
      %658 = vperm.xlu0 %657, %v632
      %v659 = vpop.permute.xlu0 %658
      %662 = vset.pattern.permute.xlu0 0
      %663 = vperm.xlu0 %662, %v633
      %v664 = vpop.permute.xlu0 %663
      %667 = vset.pattern.permute.xlu0 0
      %668 = vperm.xlu0 %667, %v634
      %v669 = vpop.permute.xlu0 %668
      %672 = vset.pattern.permute.xlu0 0
      %673 = vperm.xlu0 %672, %v635
      %v674 = vpop.permute.xlu0 %673
      %vm676 = vcmask 523264
      %v678 = vsel %vm676, %v620, 0
      %v681 = vsel %vm676, %v621, 0
      %v684 = vsel %vm676, %v622, 0
      %v687 = vsel %vm676, %v623, 0
      %v690 = vsel %vm676, %v624, 0
      %v693 = vsel %vm676, %v625, 0
      %v696 = vsel %vm676, %v626, 0
      %v699 = vsel %vm676, %v627, 0
      %701 = vmatprep.subr.mxu0 %v605
      %702 = vmatpush1.msra.mxu0 %v604
      %703 = vmatprep.subr.mxu0 %v607
      %704 = vmatpush1.msra.mxu0 %v606
      %705 = vmatprep.subr.mxu0 %v609
      %706 = vmatpush1.msra.mxu0 %v608
      %707 = vmatprep.subr.mxu0 %v611
      %708 = vmatpush1.msra.mxu0 %v610
      %709 = vmatprep.subr.mxu0 %v613
      %710 = vmatpush1.msra.mxu0 %v612
      %711 = vmatprep.subr.mxu0 %v615
      %712 = vmatpush1.msra.mxu0 %v614
      %713 = vmatprep.subr.mxu0 %v617
      %714 = vmatpush1.msra.mxu0 %v616
      %715 = vmatprep.subr.mxu0 %v619
      %716 = vmatpush1.msra.mxu0 %v618
      %717 = vmatprep.subr.mxu0 0.0
      %718 = vmatpush1.msra.mxu0 0.0
      %719 = vmatprep.subr.mxu0 0.0
      %720 = vmatpush1.msra.mxu0 0.0
      %721 = vmatprep.subr.mxu0 0.0
      %722 = vmatpush1.msra.mxu0 0.0
      %723 = vmatprep.subr.mxu0 0.0
      %724 = vmatpush1.msra.mxu0 0.0
      %725 = vmatprep.subr.mxu0 0.0
      %726 = vmatpush1.msra.mxu0 0.0
      %727 = vmatprep.subr.mxu0 0.0
      %728 = vmatpush1.msra.mxu0 0.0
      %729 = vmatprep.subr.mxu0 0.0
      %730 = vmatpush1.msra.mxu0 0.0
      %731 = vmatprep.subr.mxu0 0.0
      %732 = vmatpush1.msra.mxu0 0.0
      %733 = vmatprep.subr.mxu0 0.0
      %734 = vmatpush1.msra.mxu0 0.0
      %735 = vmatprep.subr.mxu0 0.0
      %736 = vmatpush1.msra.mxu0 0.0
      %737 = vmatprep.subr.mxu0 0.0
      %738 = vmatpush1.msra.mxu0 0.0
      %739 = vmatprep.subr.mxu0 0.0
      %740 = vmatpush1.msra.mxu0 0.0
      %741 = vmatprep.subr.mxu0 0.0
      %742 = vmatpush1.msra.mxu0 0.0
      %743 = vmatprep.subr.mxu0 0.0
      %744 = vmatpush1.msra.mxu0 0.0
      %745 = vmatprep.subr.mxu0 0.0
      %746 = vmatpush1.msra.mxu0 0.0
      %747 = vmatprep.subr.mxu0 0.0
      %748 = vmatpush1.msra.mxu0 0.0
      %749 = vmatprep.subr.mxu0 0.0
      %750 = vmatpush1.msra.mxu0 0.0
      %751 = vmatprep.subr.mxu0 0.0
      %752 = vmatpush1.msra.mxu0 0.0
      %753 = vmatprep.subr.mxu0 0.0
      %754 = vmatpush1.msra.mxu0 0.0
      %755 = vmatprep.subr.mxu0 0.0
      %756 = vmatpush1.msra.mxu0 0.0
      %757 = vmatprep.subr.mxu0 0.0
      %758 = vmatpush1.msra.mxu0 0.0
      %759 = vmatprep.subr.mxu0 0.0
      %760 = vmatpush1.msra.mxu0 0.0
      %761 = vmatprep.subr.mxu0 0.0
      %762 = vmatpush1.msra.mxu0 0.0
      %763 = vmatprep.subr.mxu0 0.0
      %764 = vmatpush1.msra.mxu0 0.0
      %765 = vmatprep.mubr.f32.mxu0 0.0
      %766 = vmatmul.mubr.f32.gmra.mrb[0].mxu0 %v678
      %v767 = vpop.f32.mrb[0].mxu0
      %v768 = vadd.f32 %v639, %v767
      %v769 = vpop.f32.mrb[0].mxu0
      %v770 = vadd.f32 %v639, %v769
      %771 = vmatprep.mubr.f32.mxu0 0.0
      %772 = vmatmul.mubr.f32.gmra.mrb[0].mxu0 %v681
      %v773 = vpop.f32.mrb[0].mxu0
      %v774 = vadd.f32 %v644, %v773
      %v775 = vpop.f32.mrb[0].mxu0
      %v776 = vadd.f32 %v644, %v775
      %777 = vmatprep.mubr.f32.mxu0 0.0
      %778 = vmatmul.mubr.f32.gmra.mrb[0].mxu0 %v684
      %v779 = vpop.f32.mrb[0].mxu0
      %v780 = vadd.f32 %v649, %v779
      %v781 = vpop.f32.mrb[0].mxu0
      %v782 = vadd.f32 %v649, %v781
      %783 = vmatprep.mubr.f32.mxu0 0.0
      %784 = vmatmul.mubr.f32.gmra.mrb[0].mxu0 %v687
      %v785 = vpop.f32.mrb[0].mxu0
      %v786 = vadd.f32 %v654, %v785
      %v787 = vpop.f32.mrb[0].mxu0
      %v788 = vadd.f32 %v654, %v787
      %789 = vmatprep.mubr.f32.mxu0 0.0
      %790 = vmatmul.mubr.f32.gmra.mrb[0].mxu0 %v690
      %v791 = vpop.f32.mrb[0].mxu0
      %v792 = vadd.f32 %v659, %v791
      %v793 = vpop.f32.mrb[0].mxu0
      %v794 = vadd.f32 %v659, %v793
      %795 = vmatprep.mubr.f32.mxu0 0.0
      %796 = vmatmul.mubr.f32.gmra.mrb[0].mxu0 %v693
      %v797 = vpop.f32.mrb[0].mxu0
      %v798 = vadd.f32 %v664, %v797
      %v799 = vpop.f32.mrb[0].mxu0
      %v800 = vadd.f32 %v664, %v799
      %801 = vmatprep.mubr.f32.mxu0 0.0
      %802 = vmatmul.mubr.f32.gmra.mrb[0].mxu0 %v696
      %v803 = vpop.f32.mrb[0].mxu0
      %v804 = vadd.f32 %v669, %v803
      %v805 = vpop.f32.mrb[0].mxu0
      %v806 = vadd.f32 %v669, %v805
      %807 = vmatprep.mubr.f32.mxu0 0.0
      %808 = vmatmul.mubr.f32.gmra.mrb[0].mxu0 %v699
      %v809 = vpop.f32.mrb[0].mxu0
      %v810 = vadd.f32 %v674, %v809
      %v811 = vpop.f32.mrb[0].mxu0
      %v812 = vadd.f32 %v674, %v811
      %813 = vdwg.mxu0
      %v814 = vtanh.pop %v768
      %v815 = vtanh.pop %v770
      %v816 = vtanh.pop %v774
      %v817 = vtanh.pop %v776
      %v818 = vtanh.pop %v780
      %v819 = vtanh.pop %v782
      %v820 = vtanh.pop %v786
      %v821 = vtanh.pop %v788
      %v822 = vtanh.pop %v792
      %v823 = vtanh.pop %v794
      %v824 = vtanh.pop %v798
      %v825 = vtanh.pop %v800
      %v826 = vtanh.pop %v804
      %v827 = vtanh.pop %v806
      %v828 = vtanh.pop %v810
      %v829 = vtanh.pop %v812
      %v830 = vld [vmem:[%s5] sm:$0xff]
      %v831 = vld [vmem:[%s5 + $0x8] sm:$0xff]
      %v832 = vld [vmem:[%s5 + $0x10] sm:$0xff]
      %v833 = vld [vmem:[%s5 + $0x18] sm:$0xff]
      %v834 = vld [vmem:[%s6] sm:$0x1]
      %v836 = vlaneseq
      %v837 = vshrl.u32 %v836, 7
      %v838 = vsub.s32 0, %v837
      %v839 = vrot.slane %v834, %v838
      %841 = vxpose.xlu0.b32.start [1/16] %v814, 128
      %842 = vxpose.xlu0.b32.cont [2/16] %v816, 128
      %843 = vxpose.xlu0.b32.cont [3/16] %v818, 128
      %844 = vxpose.xlu0.b32.cont [4/16] %v820, 128
      %845 = vxpose.xlu0.b32.cont [5/16] %v822, 128
      %846 = vxpose.xlu0.b32.cont [6/16] %v824, 128
      %847 = vxpose.xlu0.b32.cont [7/16] %v826, 128
      %848 = vxpose.xlu0.b32.cont [8/16] %v828, 128
      %849 = vxpose.xlu0.b32.cont [9/16] 0.0, 128
      %850 = vxpose.xlu0.b32.cont [10/16] 0.0, 128
      %851 = vxpose.xlu0.b32.cont [11/16] 0.0, 128
      %852 = vxpose.xlu0.b32.cont [12/16] 0.0, 128
      %853 = vxpose.xlu0.b32.cont [13/16] 0.0, 128
      %854 = vxpose.xlu0.b32.cont [14/16] 0.0, 128
      %855 = vxpose.xlu0.b32.cont [15/16] 0.0, 128
      %856 = vxpose.xlu0.b32.end [16/16] 0.0, 128
      %v857 = vpop.trf.xlu0
      %v858 = vpop.trf.xlu0
      %v859 = vpop.trf.xlu0
      %v860 = vpop.trf.xlu0
      %v861 = vpop.trf.xlu0
      %v862 = vpop.trf.xlu0
      %v863 = vpop.trf.xlu0
      %v864 = vpop.trf.xlu0
      %v865 = vpop.trf.xlu0
      %v866 = vpop.trf.xlu0
      %v867 = vpop.trf.xlu0
      %v868 = vpop.trf.xlu0
      %v869 = vpop.trf.xlu0
      %v870 = vpop.trf.xlu0
      %v871 = vpop.trf.xlu0
      %v872 = vpop.trf.xlu0
      %873 = vxpose.xlu0.b32.start [1/16] %v815, 128
      %874 = vxpose.xlu0.b32.cont [2/16] %v817, 128
      %875 = vxpose.xlu0.b32.cont [3/16] %v819, 128
      %876 = vxpose.xlu0.b32.cont [4/16] %v821, 128
      %877 = vxpose.xlu0.b32.cont [5/16] %v823, 128
      %878 = vxpose.xlu0.b32.cont [6/16] %v825, 128
      %879 = vxpose.xlu0.b32.cont [7/16] %v827, 128
      %880 = vxpose.xlu0.b32.cont [8/16] %v829, 128
      %881 = vxpose.xlu0.b32.cont [9/16] 0.0, 128
      %882 = vxpose.xlu0.b32.cont [10/16] 0.0, 128
      %883 = vxpose.xlu0.b32.cont [11/16] 0.0, 128
      %884 = vxpose.xlu0.b32.cont [12/16] 0.0, 128
      %885 = vxpose.xlu0.b32.cont [13/16] 0.0, 128
      %886 = vxpose.xlu0.b32.cont [14/16] 0.0, 128
      %887 = vxpose.xlu0.b32.cont [15/16] 0.0, 128
      %888 = vxpose.xlu0.b32.end [16/16] 0.0, 128
      %v889 = vpop.trf.xlu0
      %v890 = vpop.trf.xlu0
      %v891 = vpop.trf.xlu0
      %v892 = vpop.trf.xlu0
      %v893 = vpop.trf.xlu0
      %v894 = vpop.trf.xlu0
      %v895 = vpop.trf.xlu0
      %v896 = vpop.trf.xlu0
      %v897 = vpop.trf.xlu0
      %v898 = vpop.trf.xlu0
      %v899 = vpop.trf.xlu0
      %v900 = vpop.trf.xlu0
      %v901 = vpop.trf.xlu0
      %v902 = vpop.trf.xlu0
      %v903 = vpop.trf.xlu0
      %v904 = vpop.trf.xlu0
      %v906 = vsel %vm676, %v857, 0
      %v909 = vsel %vm676, %v858, 0
      %v912 = vsel %vm676, %v859, 0
      %v915 = vsel %vm676, %v860, 0
      %v918 = vsel %vm676, %v861, 0
      %v921 = vsel %vm676, %v862, 0
      %v924 = vsel %vm676, %v863, 0
      %v927 = vsel %vm676, %v864, 0
      %v930 = vsel %vm676, %v865, 0
      %v933 = vsel %vm676, %v866, 0
      %v936 = vsel %vm676, %v867, 0
      %v939 = vsel %vm676, %v868, 0
      %v942 = vsel %vm676, %v869, 0
      %v945 = vsel %vm676, %v870, 0
      %v948 = vsel %vm676, %v871, 0
      %v951 = vsel %vm676, %v872, 0
      %v954 = vsel %vm676, %v889, 0
      %v957 = vsel %vm676, %v890, 0
      %v960 = vsel %vm676, %v891, 0
      %v963 = vsel %vm676, %v892, 0
      %v966 = vsel %vm676, %v893, 0
      %v969 = vsel %vm676, %v894, 0
      %v972 = vsel %vm676, %v895, 0
      %v975 = vsel %vm676, %v896, 0
      %v978 = vsel %vm676, %v897, 0
      %v981 = vsel %vm676, %v898, 0
      %v984 = vsel %vm676, %v899, 0
      %v987 = vsel %vm676, %v900, 0
      %v990 = vsel %vm676, %v901, 0
      %v993 = vsel %vm676, %v902, 0
      %v996 = vsel %vm676, %v903, 0
      %v999 = vsel %vm676, %v904, 0
      %v1002 = vsel %vm676, %v830, 0
      %v1005 = vsel %vm676, %v831, 0
      %v1008 = vsel %vm676, %v832, 0
      %v1011 = vsel %vm676, %v833, 0
      %1013 = vmatprep.subr.mxu0 0.0
      %1014 = vmatpush1.xpose.msra.mxu0 %v1002
      %1015 = vmatprep.subr.mxu0 0.0
      %1016 = vmatpush1.xpose.msra.mxu0 %v1005
      %1017 = vmatprep.subr.mxu0 0.0
      %1018 = vmatpush1.xpose.msra.mxu0 %v1008
      %1019 = vmatprep.subr.mxu0 0.0
      %1020 = vmatpush1.xpose.msra.mxu0 %v1011
      %1021 = vmatprep.subr.mxu0 0.0
      %1022 = vmatpush1.xpose.msra.mxu0 0.0
      %1023 = vmatprep.subr.mxu0 0.0
      %1024 = vmatpush1.xpose.msra.mxu0 0.0
      %1025 = vmatprep.subr.mxu0 0.0
      %1026 = vmatpush1.xpose.msra.mxu0 0.0
      %1027 = vmatprep.subr.mxu0 0.0
      %1028 = vmatpush1.xpose.msra.mxu0 0.0
      %1029 = vmatprep.subr.mxu0 0.0
      %1030 = vmatpush1.xpose.msra.mxu0 0.0
      %1031 = vmatprep.subr.mxu0 0.0
      %1032 = vmatpush1.xpose.msra.mxu0 0.0
      %1033 = vmatprep.subr.mxu0 0.0
      %1034 = vmatpush1.xpose.msra.mxu0 0.0
      %1035 = vmatprep.subr.mxu0 0.0
      %1036 = vmatpush1.xpose.msra.mxu0 0.0
      %1037 = vmatprep.subr.mxu0 0.0
      %1038 = vmatpush1.xpose.msra.mxu0 0.0
      %1039 = vmatprep.subr.mxu0 0.0
      %1040 = vmatpush1.xpose.msra.mxu0 0.0
      %1041 = vmatprep.subr.mxu0 0.0
      %1042 = vmatpush1.xpose.msra.mxu0 0.0
      %1043 = vmatprep.subr.mxu0 0.0
      %1044 = vmatpush1.xpose.msra.mxu0 0.0
      %1045 = vmatprep.subr.mxu0 0.0
      %1046 = vmatpush1.xpose.msra.mxu0 0.0
      %1047 = vmatprep.subr.mxu0 0.0
      %1048 = vmatpush1.xpose.msra.mxu0 0.0
      %1049 = vmatprep.subr.mxu0 0.0
      %1050 = vmatpush1.xpose.msra.mxu0 0.0
      %1051 = vmatprep.subr.mxu0 0.0
      %1052 = vmatpush1.xpose.msra.mxu0 0.0
      %1053 = vmatprep.subr.mxu0 0.0
      %1054 = vmatpush1.xpose.msra.mxu0 0.0
      %1055 = vmatprep.subr.mxu0 0.0
      %1056 = vmatpush1.xpose.msra.mxu0 0.0
      %1057 = vmatprep.subr.mxu0 0.0
      %1058 = vmatpush1.xpose.msra.mxu0 0.0
      %1059 = vmatprep.subr.mxu0 0.0
      %1060 = vmatpush1.xpose.msra.mxu0 0.0
      %1061 = vmatprep.subr.mxu0 0.0
      %1062 = vmatpush1.xpose.msra.mxu0 0.0
      %1063 = vmatprep.subr.mxu0 0.0
      %1064 = vmatpush1.xpose.msra.mxu0 0.0
      %1065 = vmatprep.subr.mxu0 0.0
      %1066 = vmatpush1.xpose.msra.mxu0 0.0
      %1067 = vmatprep.subr.mxu0 0.0
      %1068 = vmatpush1.xpose.msra.mxu0 0.0
      %1069 = vmatprep.subr.mxu0 0.0
      %1070 = vmatpush1.xpose.msra.mxu0 0.0
      %1071 = vmatprep.subr.mxu0 0.0
      %1072 = vmatpush1.xpose.msra.mxu0 0.0
      %1073 = vmatprep.subr.mxu0 0.0
      %1074 = vmatpush1.xpose.msra.mxu0 0.0
      %1075 = vmatprep.subr.mxu0 0.0
      %1076 = vmatpush1.xpose.msra.mxu0 0.0
      %1077 = vmatprep.mubr.f32.mxu0 0.0
      %1078 = vmatmul.mubr.f32.gmra.mrb[0].mxu0 %v906
      %v1079 = vpop.f32.mrb[0].mxu0
      %v1080 = vadd.f32 %v839, %v1079
      %v1081 = vpop.f32.mrb[0].mxu0
      %1082 = vmatprep.mubr.f32.mxu0 0.0
      %1083 = vmatmul.mubr.f32.gmra.mrb[0].mxu0 %v909
      %v1084 = vpop.f32.mrb[0].mxu0
      %v1085 = vadd.f32 %v839, %v1084
      %v1086 = vpop.f32.mrb[0].mxu0
      %1087 = vmatprep.mubr.f32.mxu0 0.0
      %1088 = vmatmul.mubr.f32.gmra.mrb[0].mxu0 %v912
      %v1089 = vpop.f32.mrb[0].mxu0
      %v1090 = vadd.f32 %v839, %v1089
      %v1091 = vpop.f32.mrb[0].mxu0
      %1092 = vmatprep.mubr.f32.mxu0 0.0
      %1093 = vmatmul.mubr.f32.gmra.mrb[0].mxu0 %v915
      %v1094 = vpop.f32.mrb[0].mxu0
      %v1095 = vadd.f32 %v839, %v1094
      %v1096 = vpop.f32.mrb[0].mxu0
      %1097 = vmatprep.mubr.f32.mxu0 0.0
      %1098 = vmatmul.mubr.f32.gmra.mrb[0].mxu0 %v918
      %v1099 = vpop.f32.mrb[0].mxu0
      %v1100 = vadd.f32 %v839, %v1099
      %v1101 = vpop.f32.mrb[0].mxu0
      %1102 = vmatprep.mubr.f32.mxu0 0.0
      %1103 = vmatmul.mubr.f32.gmra.mrb[0].mxu0 %v921
      %v1104 = vpop.f32.mrb[0].mxu0
      %v1105 = vadd.f32 %v839, %v1104
      %v1106 = vpop.f32.mrb[0].mxu0
      %1107 = vmatprep.mubr.f32.mxu0 0.0
      %1108 = vmatmul.mubr.f32.gmra.mrb[0].mxu0 %v924
      %v1109 = vpop.f32.mrb[0].mxu0
      %v1110 = vadd.f32 %v839, %v1109
      %v1111 = vpop.f32.mrb[0].mxu0
      %1112 = vmatprep.mubr.f32.mxu0 0.0
      %1113 = vmatmul.mubr.f32.gmra.mrb[0].mxu0 %v927
      %v1114 = vpop.f32.mrb[0].mxu0
      %v1115 = vadd.f32 %v839, %v1114
      %v1116 = vpop.f32.mrb[0].mxu0
      %1117 = vmatprep.mubr.f32.mxu0 0.0
      %1118 = vmatmul.mubr.f32.gmra.mrb[0].mxu0 %v930
      %v1119 = vpop.f32.mrb[0].mxu0
      %v1120 = vadd.f32 %v839, %v1119
      %v1121 = vpop.f32.mrb[0].mxu0
      %1122 = vmatprep.mubr.f32.mxu0 0.0
      %1123 = vmatmul.mubr.f32.gmra.mrb[0].mxu0 %v933
      %v1124 = vpop.f32.mrb[0].mxu0
      %v1125 = vadd.f32 %v839, %v1124
      %v1126 = vpop.f32.mrb[0].mxu0
      %1127 = vmatprep.mubr.f32.mxu0 0.0
      %1128 = vmatmul.mubr.f32.gmra.mrb[0].mxu0 %v936
      %v1129 = vpop.f32.mrb[0].mxu0
      %v1130 = vadd.f32 %v839, %v1129
      %v1131 = vpop.f32.mrb[0].mxu0
      %1132 = vmatprep.mubr.f32.mxu0 0.0
      %1133 = vmatmul.mubr.f32.gmra.mrb[0].mxu0 %v939
      %v1134 = vpop.f32.mrb[0].mxu0
      %v1135 = vadd.f32 %v839, %v1134
      %v1136 = vpop.f32.mrb[0].mxu0
      %1137 = vmatprep.mubr.f32.mxu0 0.0
      %1138 = vmatmul.mubr.f32.gmra.mrb[0].mxu0 %v942
      %v1139 = vpop.f32.mrb[0].mxu0
      %v1140 = vadd.f32 %v839, %v1139
      %v1141 = vpop.f32.mrb[0].mxu0
      %1142 = vmatprep.mubr.f32.mxu0 0.0
      %1143 = vmatmul.mubr.f32.gmra.mrb[0].mxu0 %v945
      %v1144 = vpop.f32.mrb[0].mxu0
      %v1145 = vadd.f32 %v839, %v1144
      %v1146 = vpop.f32.mrb[0].mxu0
      %1147 = vmatprep.mubr.f32.mxu0 0.0
      %1148 = vmatmul.mubr.f32.gmra.mrb[0].mxu0 %v948
      %v1149 = vpop.f32.mrb[0].mxu0
      %v1150 = vadd.f32 %v839, %v1149
      %v1151 = vpop.f32.mrb[0].mxu0
      %1152 = vmatprep.mubr.f32.mxu0 0.0
      %1153 = vmatmul.mubr.f32.gmra.mrb[0].mxu0 %v951
      %v1154 = vpop.f32.mrb[0].mxu0
      %v1155 = vadd.f32 %v839, %v1154
      %v1156 = vpop.f32.mrb[0].mxu0
      %1157 = vmatprep.mubr.f32.mxu0 0.0
      %1158 = vmatmul.mubr.f32.gmra.mrb[0].mxu0 %v954
      %v1159 = vpop.f32.mrb[0].mxu0
      %v1160 = vadd.f32 %v839, %v1159
      %v1161 = vpop.f32.mrb[0].mxu0
      %1162 = vmatprep.mubr.f32.mxu0 0.0
      %1163 = vmatmul.mubr.f32.gmra.mrb[0].mxu0 %v957
      %v1164 = vpop.f32.mrb[0].mxu0
      %v1165 = vadd.f32 %v839, %v1164
      %v1166 = vpop.f32.mrb[0].mxu0
      %1167 = vmatprep.mubr.f32.mxu0 0.0
      %1168 = vmatmul.mubr.f32.gmra.mrb[0].mxu0 %v960
      %v1169 = vpop.f32.mrb[0].mxu0
      %v1170 = vadd.f32 %v839, %v1169
      %v1171 = vpop.f32.mrb[0].mxu0
      %1172 = vmatprep.mubr.f32.mxu0 0.0
      %1173 = vmatmul.mubr.f32.gmra.mrb[0].mxu0 %v963
      %v1174 = vpop.f32.mrb[0].mxu0
      %v1175 = vadd.f32 %v839, %v1174
      %v1176 = vpop.f32.mrb[0].mxu0
      %1177 = vmatprep.mubr.f32.mxu0 0.0
      %1178 = vmatmul.mubr.f32.gmra.mrb[0].mxu0 %v966
      %v1179 = vpop.f32.mrb[0].mxu0
      %v1180 = vadd.f32 %v839, %v1179
      %v1181 = vpop.f32.mrb[0].mxu0
      %1182 = vmatprep.mubr.f32.mxu0 0.0
      %1183 = vmatmul.mubr.f32.gmra.mrb[0].mxu0 %v969
      %v1184 = vpop.f32.mrb[0].mxu0
      %v1185 = vadd.f32 %v839, %v1184
      %v1186 = vpop.f32.mrb[0].mxu0
      %1187 = vmatprep.mubr.f32.mxu0 0.0
      %1188 = vmatmul.mubr.f32.gmra.mrb[0].mxu0 %v972
      %v1189 = vpop.f32.mrb[0].mxu0
      %v1190 = vadd.f32 %v839, %v1189
      %v1191 = vpop.f32.mrb[0].mxu0
      %1192 = vmatprep.mubr.f32.mxu0 0.0
      %1193 = vmatmul.mubr.f32.gmra.mrb[0].mxu0 %v975
      %v1194 = vpop.f32.mrb[0].mxu0
      %v1195 = vadd.f32 %v839, %v1194
      %v1196 = vpop.f32.mrb[0].mxu0
      %1197 = vmatprep.mubr.f32.mxu0 0.0
      %1198 = vmatmul.mubr.f32.gmra.mrb[0].mxu0 %v978
      %v1199 = vpop.f32.mrb[0].mxu0
      %v1200 = vadd.f32 %v839, %v1199
      %v1201 = vpop.f32.mrb[0].mxu0
      %1202 = vmatprep.mubr.f32.mxu0 0.0
      %1203 = vmatmul.mubr.f32.gmra.mrb[0].mxu0 %v981
      %v1204 = vpop.f32.mrb[0].mxu0
      %v1205 = vadd.f32 %v839, %v1204
      %v1206 = vpop.f32.mrb[0].mxu0
      %1207 = vmatprep.mubr.f32.mxu0 0.0
      %1208 = vmatmul.mubr.f32.gmra.mrb[0].mxu0 %v984
      %v1209 = vpop.f32.mrb[0].mxu0
      %v1210 = vadd.f32 %v839, %v1209
      %v1211 = vpop.f32.mrb[0].mxu0
      %1212 = vmatprep.mubr.f32.mxu0 0.0
      %1213 = vmatmul.mubr.f32.gmra.mrb[0].mxu0 %v987
      %v1214 = vpop.f32.mrb[0].mxu0
      %v1215 = vadd.f32 %v839, %v1214
      %v1216 = vpop.f32.mrb[0].mxu0
      %1217 = vmatprep.mubr.f32.mxu0 0.0
      %1218 = vmatmul.mubr.f32.gmra.mrb[0].mxu0 %v990
      %v1219 = vpop.f32.mrb[0].mxu0
      %v1220 = vadd.f32 %v839, %v1219
      %v1221 = vpop.f32.mrb[0].mxu0
      %1222 = vmatprep.mubr.f32.mxu0 0.0
      %1223 = vmatmul.mubr.f32.gmra.mrb[0].mxu0 %v993
      %v1224 = vpop.f32.mrb[0].mxu0
      %v1225 = vadd.f32 %v839, %v1224
      %v1226 = vpop.f32.mrb[0].mxu0
      %1227 = vmatprep.mubr.f32.mxu0 0.0
      %1228 = vmatmul.mubr.f32.gmra.mrb[0].mxu0 %v996
      %v1229 = vpop.f32.mrb[0].mxu0
      %v1230 = vadd.f32 %v839, %v1229
      %v1231 = vpop.f32.mrb[0].mxu0
      %1232 = vmatprep.mubr.f32.mxu0 0.0
      %1233 = vmatmul.mubr.f32.gmra.mrb[0].mxu0 %v999
      %v1234 = vpop.f32.mrb[0].mxu0
      %v1235 = vadd.f32 %v839, %v1234
      %v1236 = vpop.f32.mrb[0].mxu0
      %1237 = vdwg.mxu0
      %1238 = vst.msk [vmem:[%s280] sm:$0xff] %vm370, %v1080
      %1239 = vst.msk [vmem:[%s280 + $0x8] sm:$0xff] %vm370, %v1085
      %1240 = vst.msk [vmem:[%s280 + $0x10] sm:$0xff] %vm370, %v1090
      %1241 = vst.msk [vmem:[%s280 + $0x18] sm:$0xff] %vm370, %v1095
      %1242 = vst.msk [vmem:[%s280 + $0x20] sm:$0xff] %vm370, %v1100
      %1243 = vst.msk [vmem:[%s280 + $0x28] sm:$0xff] %vm370, %v1105
      %1244 = vst.msk [vmem:[%s280 + $0x30] sm:$0xff] %vm370, %v1110
      %1245 = vst.msk [vmem:[%s280 + $0x38] sm:$0xff] %vm370, %v1115
      %1246 = vst.msk [vmem:[%s280 + $0x40] sm:$0xff] %vm370, %v1120
      %1247 = vst.msk [vmem:[%s280 + $0x48] sm:$0xff] %vm370, %v1125
      %1248 = vst.msk [vmem:[%s280 + $0x50] sm:$0xff] %vm370, %v1130
      %1249 = vst.msk [vmem:[%s280 + $0x58] sm:$0xff] %vm370, %v1135
      %1250 = vst.msk [vmem:[%s280 + $0x60] sm:$0xff] %vm370, %v1140
      %1251 = vst.msk [vmem:[%s280 + $0x68] sm:$0xff] %vm370, %v1145
      %1252 = vst.msk [vmem:[%s280 + $0x70] sm:$0xff] %vm370, %v1150
      %1253 = vst.msk [vmem:[%s280 + $0x78] sm:$0xff] %vm370, %v1155
      %1254 = vst.msk [vmem:[%s280 + $0x80] sm:$0xff] %vm370, %v1160
      %1255 = vst.msk [vmem:[%s280 + $0x88] sm:$0xff] %vm370, %v1165
      %1256 = vst.msk [vmem:[%s280 + $0x90] sm:$0xff] %vm370, %v1170
      %1257 = vst.msk [vmem:[%s280 + $0x98] sm:$0xff] %vm370, %v1175
      %1258 = vst.msk [vmem:[%s280 + $0xa0] sm:$0xff] %vm370, %v1180
      %1259 = vst.msk [vmem:[%s280 + $0xa8] sm:$0xff] %vm370, %v1185
      %1260 = vst.msk [vmem:[%s280 + $0xb0] sm:$0xff] %vm370, %v1190
      %1261 = vst.msk [vmem:[%s280 + $0xb8] sm:$0xff] %vm370, %v1195
      %1262 = vst.msk [vmem:[%s280 + $0xc0] sm:$0xff] %vm370, %v1200
      %1263 = vst.msk [vmem:[%s280 + $0xc8] sm:$0xff] %vm370, %v1205
      %1264 = vst.msk [vmem:[%s280 + $0xd0] sm:$0xff] %vm370, %v1210
      %1265 = vst.msk [vmem:[%s280 + $0xd8] sm:$0xff] %vm370, %v1215
      %1266 = vst.msk [vmem:[%s280 + $0xe0] sm:$0xff] %vm370, %v1220
      %1267 = vst.msk [vmem:[%s280 + $0xe8] sm:$0xff] %vm370, %v1225
      %1268 = vst.msk [vmem:[%s280 + $0xf0] sm:$0xff] %vm370, %v1230
      %1269 = vst.msk [vmem:[%s280 + $0xf8] sm:$0xff] %vm370, %v1235
      %s1270 = smul.u32 32, %s18
      %p1271 = scmp.lt.s32.totalorder %s1270, 63
      %s1272 = scalar_select %p1271, %s1270, 63
      %s1273 = smul.addr %s1272, 8
      %s1274 = scalar_lea.vmem %s7, %s1273
      // Predicated region
      $region49: #{ode_function.1} parent=47 // pred_check
        %p1275 = pneg %p188
      $region50: #{ode_function.1} parent=47 // pred_check_branch
        %1277 = sbr.rel (%p1275) target = $region52
      $region51: #{ode_function.1} parent=47 // pred_region
        %s1278 = smul.u32 32, %s18
      $region52: #{ode_function.1} parent=47 // pred_fallthru
        _
    $region48: #{ode_function.1} parent=5 // pred_fallthru
      _
    %p1279 = scmp.le.s32.totalorder 2, %s13
    // Predicated region
    $region53: #{ode_function.1} parent=5 // pred_check
      %p1280 = pneg %p1279
    $region54: #{ode_function.1} parent=5 // pred_check_branch
      %1282 = sbr.rel (%p1280) target = $region56
    $region55: #{ode_function.1} parent=5 // pred_region
      %s1283 = ssub.s32 %s13, 2
      // Predicated region
      $region57: #{ode_function.1} parent=55 // pred_check
        %p1284 = pneg %p194
      $region58: #{ode_function.1} parent=55 // pred_check_branch
        %1286 = sbr.rel (%p1284) target = $region60
      $region59: #{ode_function.1} parent=55 // pred_region
        %s1287 = smul.u32 32, %s19
        %p1288 = scmp.lt.s32.totalorder %s1287, 63
        %s1289 = scalar_select %p1288, %s1287, 63
        %s1290 = smul.addr %s1289, 8
        %s1291 = scalar_lea.vmem %s7, %s1290
      $region60: #{ode_function.1} parent=55 // pred_fallthru
        _
    $region56: #{ode_function.1} parent=5 // pred_fallthru
      _
  $region6: #{ode_function.1} parent=0 // loop_footer
    %s17 = sadd.s32 1, %s13
  $region7: #{ode_function.1} parent=0 // loop_footer_branch
    %12 = sbr.rel target = $region3
  $region8: #{ode_function.1} parent=0 // loop_exit
    _

</llo_original>
